<compile_context>
chip_gen: v7x
topology: tpu7x:2x2x1
jax: 0.10.0
libtpu: 0.0.40
codegen_flags: <defaults>
</compile_context>

<pallas_src>
import functools

import jax
import jax.numpy as jnp
from jax import lax
from jax.experimental import pallas as pl
from jax.experimental.pallas import tpu as pltpu

_SUBLANE = 8
_MAX_TILE_B = 2048
_FALLBACK_VMEM = 48 * 1024 * 1024  # safe on v7x (64 MiB phys) and v5e/v6e


def _round_up(n, m):
    return ((n + m - 1) // m) * m


def _pick_vmem_limit():
    try:
        cap = int(pltpu.get_tpu_info().vmem_capacity_bytes)
        return min(cap * 3 // 4, 96 * 1024 * 1024)
    except Exception:
        return _FALLBACK_VMEM


def _auto_tile_b(B, in_size, out_size, vmem_limit):
    # Double-buffered per-batch-row bytes in VMEM: x tile + out tile + target
    # tile.  Resident weight/bias are also double-buffered by the pipeline.
    row_bytes = 2 * 4 * (in_size + 2 * out_size)
    resident = 2 * 4 * (in_size * out_size + out_size)
    budget = max(vmem_limit // 2 - resident, _SUBLANE * row_bytes)
    tb = min(_MAX_TILE_B, budget // row_bytes)
    return max(_SUBLANE, int(tb))
    # TODO(synk): for very large in_size/out_size add an OUT/K grid axis and
    # single-buffer the resident weight block so it fits v7x's 64 MiB VMEM.


def _linear_kernel(x_ref, w_ref, b_ref, out_ref):
    acc = jnp.dot(x_ref[...], w_ref[...], preferred_element_type=jnp.float32)
    out_ref[...] = (acc + b_ref[...]).astype(out_ref.dtype)


def _linear_rmse_kernel(x_ref, w_ref, b_ref, t_ref, out_ref, sse_ref, *,
                        valid_last_rows, tile_b):
    i = pl.program_id(0)
    n = pl.num_programs(0)

    acc = jnp.dot(x_ref[...], w_ref[...], preferred_element_type=jnp.float32)
    out = acc + b_ref[...]
    out_ref[...] = out.astype(out_ref.dtype)

    diff = out - t_ref[...]

    def _partial(d):
        # (tile_b, OUT) -> (1, 1, OUT): per-tile partial sum of squares.
        return jnp.sum(d * d, axis=0, keepdims=True)[None]

    if valid_last_rows == tile_b:
        # B is tile-aligned (known statically): no masking anywhere.
        sse_ref[...] = _partial(diff)
    else:
        @pl.when(i < n - 1)
        def _steady():
            sse_ref[...] = _partial(diff)

        @pl.when(i == n - 1)
        def _last():
            # Only the final tile has padded batch rows; mask just those.
            row = lax.broadcasted_iota(jnp.int32, diff.shape, 0)
            sse_ref[...] = _partial(jnp.where(row < valid_last_rows, diff, 0.0))


def regression_model_forward(x, weight, bias, target=None, *, tile_b=None):
    """Mirror of RegressionModel.forward(x, target).

    x:      (B, input_size)            float32
    weight: (output_size, input_size)  float32 (PyTorch nn.Linear layout)
    bias:   (output_size,)             float32
    target: (B, output_size) float32 or None
    returns (out, loss); loss is a scalar or None.
    """
    x = jnp.asarray(x, jnp.float32)
    weight = jnp.asarray(weight, jnp.float32)
    bias = jnp.asarray(bias, jnp.float32)

    B, in_size = x.shape
    out_size = weight.shape[0]

    vmem_limit = _pick_vmem_limit()
    if tile_b is None:
        tile_b = _auto_tile_b(B, in_size, out_size, vmem_limit)
    tb = _round_up(min(tile_b, _round_up(B, _SUBLANE)), _SUBLANE)
    b_p = _round_up(B, tb)
    num_tiles = b_p // tb
    grid = (num_tiles,)

    # One-time wrapper-side transpose (tiny, once per call) so the in-loop
    # contraction is a plain x @ w with no per-step transpose of resident W.
    w_t = jnp.transpose(weight)                    # (IN, OUT)
    bias_2d = bias.reshape(1, out_size)

    # Only materialize a padded copy when B is not tile-aligned.
    x_p = x if b_p == B else jnp.pad(x, ((0, b_p - B), (0, 0)))

    x_spec = pl.BlockSpec((tb, in_size), lambda i: (i, 0))
    w_spec = pl.BlockSpec((in_size, out_size), lambda i: (0, 0))    # resident
    b_spec = pl.BlockSpec((1, out_size), lambda i: (0, 0))          # resident
    out_spec = pl.BlockSpec((tb, out_size), lambda i: (i, 0))

    flops = 2 * b_p * in_size * out_size
    base_bytes = 4 * (b_p * in_size + in_size * out_size + out_size
                      + b_p * out_size)

    if target is None:
        out_full = pl.pallas_call(
            _linear_kernel,
            out_shape=jax.ShapeDtypeStruct((b_p, out_size), jnp.float32),
            grid_spec=pltpu.PrefetchScalarGridSpec(
                num_scalar_prefetch=0,
                grid=grid,
                in_specs=[x_spec, w_spec, b_spec],
                out_specs=out_spec,
            ),
            compiler_params=pltpu.CompilerParams(
                dimension_semantics=("parallel",),
                vmem_limit_bytes=vmem_limit),
            cost_estimate=pl.CostEstimate(
                flops=flops, bytes_accessed=base_bytes, transcendentals=0),
        )(x_p, w_t, bias_2d)
        out = out_full if b_p == B else out_full[:B]
        return out, None

    target = jnp.asarray(target, jnp.float32)
    t_p = target if b_p == B else jnp.pad(target, ((0, b_p - B), (0, 0)))
    t_spec = pl.BlockSpec((tb, out_size), lambda i: (i, 0))

    # Per-tile partial SSE: unique block per grid step, so the grid axis stays
    # "parallel" (2 TCs on v7x).  Final sum + sqrt done in the wrapper.
    sse_spec = pl.BlockSpec((1, 1, out_size), lambda i: (i, 0, 0))

    valid_last_rows = B - (num_tiles - 1) * tb
    kernel = functools.partial(
        _linear_rmse_kernel, valid_last_rows=valid_last_rows, tile_b=tb)

    out_full, partial_sse = pl.pallas_call(
        kernel,
        out_shape=(
            jax.ShapeDtypeStruct((b_p, out_size), jnp.float32),
            jax.ShapeDtypeStruct((num_tiles, 1, out_size), jnp.float32),
        ),
        grid_spec=pltpu.PrefetchScalarGridSpec(
            num_scalar_prefetch=0,
            grid=grid,
            in_specs=[x_spec, w_spec, b_spec, t_spec],
            out_specs=(out_spec, sse_spec),
        ),
        compiler_params=pltpu.CompilerParams(
            dimension_semantics=("parallel",),
            vmem_limit_bytes=vmem_limit),
        cost_estimate=pl.CostEstimate(
            flops=flops + 4 * b_p * out_size,
            bytes_accessed=base_bytes + 4 * (b_p + num_tiles) * out_size,
            transcendentals=0),
    )(x_p, w_t, bias_2d, t_p)

    # Tiny cross-tile reduction + sqrt (O(num_tiles * out_size) elements).
    loss = jnp.sqrt(jnp.sum(partial_sse) / jnp.float32(B * out_size))
    out = out_full if b_p == B else out_full[:B]
    return out, loss


if __name__ == "__main__":
    key = jax.random.PRNGKey(0)
    k_x, k_t, k_w, k_b, k_x2, k_t2 = jax.random.split(key, 6)

    batch = 8
    input_size = 32
    output_size = 16

    x = jax.random.normal(k_x, (batch, input_size), dtype=jnp.float32)
    target = jax.random.normal(k_t, (batch, output_size), dtype=jnp.float32)

    # Deterministic parameter init (PyTorch nn.Linear shapes).
    bound = 1.0 / jnp.sqrt(jnp.float32(input_size))
    weight = jax.random.uniform(
        k_w, (output_size, input_size), minval=-bound, maxval=bound,
        dtype=jnp.float32)
    bias = jax.random.uniform(
        k_b, (output_size,), minval=-bound, maxval=bound, dtype=jnp.float32)

    ref_out = x @ weight.T + bias
    ref_loss = jnp.sqrt(jnp.mean((ref_out - target) ** 2))

    # --- single-tile path (auto tile, grid=(1,)) ---
    out, loss = regression_model_forward(x, weight, bias, target)
    jax.block_until_ready((out, loss))
    assert out.shape == (batch, output_size)
    assert jnp.allclose(out, ref_out, atol=1e-5, rtol=1e-5)
    assert jnp.allclose(loss, ref_loss, atol=1e-5, rtol=1e-5)

    # --- target=None path ---
    out2, loss2 = regression_model_forward(x, weight, bias, None)
    jax.block_until_ready(out2)
    assert loss2 is None
    assert jnp.allclose(out2, ref_out, atol=1e-5, rtol=1e-5)

    # --- multi-tile path (grid=(3,), batch 20 padded to 24, masked last tile) ---
    batch3 = 20
    x3 = jax.random.normal(k_x2, (batch3, input_size), dtype=jnp.float32)
    t3 = jax.random.normal(k_t2, (batch3, output_size), dtype=jnp.float32)
    ref_out3 = x3 @ weight.T + bias
    ref_loss3 = jnp.sqrt(jnp.mean((ref_out3 - t3) ** 2))

    out3, loss3 = regression_model_forward(x3, weight, bias, t3, tile_b=8)
    jax.block_until_ready((out3, loss3))
    assert out3.shape == (batch3, output_size)
    assert jnp.allclose(out3, ref_out3, atol=1e-5, rtol=1e-5)
    assert jnp.allclose(loss3, ref_loss3, atol=1e-5, rtol=1e-5)

    # --- single padded tile with auto tiling (B=20 -> tb=24, masked rows) ---
    out4, loss4 = regression_model_forward(x3, weight, bias, t3)
    jax.block_until_ready((out4, loss4))
    assert jnp.allclose(out4, ref_out3, atol=1e-5, rtol=1e-5)
    assert jnp.allclose(loss4, ref_loss3, atol=1e-5, rtol=1e-5)

    print("KERNEL_OK")
</pallas_src>

<mosaic_0001>
module attributes {stable_mosaic.version = 11 : i64} {
  func.func @_linear_rmse_kernel(%arg0: i32, %arg1: memref<8x32xf32, #tpu.memory_space<vmem>>, %arg2: memref<32x16xf32, #tpu.memory_space<vmem>>, %arg3: memref<1x16xf32, #tpu.memory_space<vmem>>, %arg4: memref<8x16xf32, #tpu.memory_space<vmem>>, %arg5: memref<8x16xf32, #tpu.memory_space<vmem>>, %arg6: memref<1x1x16xf32, #tpu.memory_space<vmem>>) attributes {dimension_semantics = [#tpu.dimension_semantics<parallel>], iteration_bounds = array<i64: 1>, scalar_prefetch = 0 : i64, scratch_operands = 0 : i64, tpu.core_type = #tpu.core_type<tc>, window_params = [{transform_indices = @transform_0, window_bounds = array<i64: 8, 32>}, {pipeline_mode = #tpu.pipeline_mode<synchronous>, transform_indices = @transform_1, window_bounds = array<i64: 32, 16>}, {pipeline_mode = #tpu.pipeline_mode<synchronous>, transform_indices = @transform_2, window_bounds = array<i64: 1, 16>}, {transform_indices = @transform_3, window_bounds = array<i64: 8, 16>}, {transform_indices = @transform_4, window_bounds = array<i64: 8, 16>}, {transform_indices = @transform_5, window_bounds = array<i64: 1, 1, 16>}]} {
    %c0 = arith.constant 0 : index
    %c0_0 = arith.constant 0 : index
    %0 = vector.load %arg1[%c0, %c0_0] : memref<8x32xf32, #tpu.memory_space<vmem>>, vector<8x32xf32>
    %c0_1 = arith.constant 0 : index
    %c0_2 = arith.constant 0 : index
    %1 = vector.load %arg2[%c0_1, %c0_2] : memref<32x16xf32, #tpu.memory_space<vmem>>, vector<32x16xf32>
    %cst = arith.constant dense<0.000000e+00> : vector<8x16xf32>
    %2 = tpu.matmul %0, %1, %cst {dimension_numbers = #tpu.dot_dimension_numbers<[1], [0], [0], [1], [0, 0, 1, 1], [], []>} : vector<8x32xf32>, vector<32x16xf32>, vector<8x16xf32> -> vector<8x16xf32>
    %c0_3 = arith.constant 0 : index
    %c0_4 = arith.constant 0 : index
    %3 = vector.load %arg3[%c0_3, %c0_4] : memref<1x16xf32, #tpu.memory_space<vmem>>, vector<1x16xf32>
    %4 = vector.broadcast %3 : vector<1x16xf32> to vector<8x16xf32>
    %5 = arith.addf %2, %4 : vector<8x16xf32>
    %c0_5 = arith.constant 0 : index
    %c0_6 = arith.constant 0 : index
    %6 = vector.load %arg5[%c0_5, %c0_6] : memref<8x16xf32, #tpu.memory_space<vmem>>, vector<8x16xf32>
    tpu.vector_store %arg5[%c0_5, %c0_6], %5 {strides = array<i32>} : memref<8x16xf32, #tpu.memory_space<vmem>>, vector<8x16xf32>,
    %c0_7 = arith.constant 0 : index
    %c0_8 = arith.constant 0 : index
    %7 = vector.load %arg4[%c0_7, %c0_8] : memref<8x16xf32, #tpu.memory_space<vmem>>, vector<8x16xf32>
    %8 = arith.subf %5, %7 : vector<8x16xf32>
    %9 = arith.mulf %8, %8 : vector<8x16xf32>
    %cst_9 = arith.constant dense<0.000000e+00> : vector<16xf32>
    %10 = vector.multi_reduction <add>, %9, %cst_9 [0] : vector<8x16xf32> to vector<16xf32>
    %11 = vector.shape_cast %10 : vector<16xf32> to vector<1x16xf32>
    %12 = vector.shape_cast %11 : vector<1x16xf32> to vector<1x1x16xf32>
    %c0_10 = arith.constant 0 : index
    %c0_11 = arith.constant 0 : index
    %c0_12 = arith.constant 0 : index
    %13 = vector.load %arg6[%c0_10, %c0_11, %c0_12] : memref<1x1x16xf32, #tpu.memory_space<vmem>>, vector<1x1x16xf32>
    tpu.vector_store %arg6[%c0_10, %c0_11, %c0_12], %12 {strides = array<i32>} : memref<1x1x16xf32, #tpu.memory_space<vmem>>, vector<1x1x16xf32>,
    return
  }
  func.func @transform_0(%arg0: i32) -> (i32, i32) {
    %c0_i32 = arith.constant 0 : i32
    %c0_i32_0 = arith.constant 0 : i32
    return %arg0, %c0_i32 : i32, i32
  }
  func.func @transform_1(%arg0: i32) -> (i32, i32) {
    %c0_i32 = arith.constant 0 : i32
    %c0_i32_0 = arith.constant 0 : i32
    %c0_i32_1 = arith.constant 0 : i32
    return %c0_i32, %c0_i32_0 : i32, i32
  }
  func.func @transform_2(%arg0: i32) -> (i32, i32) {
    %c0_i32 = arith.constant 0 : i32
    %c0_i32_0 = arith.constant 0 : i32
    %c0_i32_1 = arith.constant 0 : i32
    return %c0_i32, %c0_i32_0 : i32, i32
  }
  func.func @transform_3(%arg0: i32) -> (i32, i32) {
    %c0_i32 = arith.constant 0 : i32
    %c0_i32_0 = arith.constant 0 : i32
    return %arg0, %c0_i32 : i32, i32
  }
  func.func @transform_4(%arg0: i32) -> (i32, i32) {
    %c0_i32 = arith.constant 0 : i32
    %c0_i32_0 = arith.constant 0 : i32
    return %arg0, %c0_i32 : i32, i32
  }
  func.func @transform_5(%arg0: i32) -> (i32, i32, i32) {
    %c0_i32 = arith.constant 0 : i32
    %c0_i32_0 = arith.constant 0 : i32
    %c0_i32_1 = arith.constant 0 : i32
    return %arg0, %c0_i32, %c0_i32_0 : i32, i32, i32
  }
}

</mosaic_0001>

<llo_original>
// kernel: tpu_custom_call.1
$region0: #{tpu_custom_call.1}
  #allocation0 [shape = 'u32[]', space=smem, size = 0x4, offset = 0x4, fixed_abs, tag = 'smem constant byte address 0x4 - core index']
  #allocation1 [shape = 'u32[144,128]{1,0:T(1,128)}', space=vmem, size = 0x12000, scoped, tag = 'internal scratch']
  %s0 = inlined_call_operand.vmem [shape: f32[8,32], index: 0, kind: input, shape index: {}]
  %s1 = inlined_call_operand.vmem [shape: f32[32,16], index: 1, kind: input, shape index: {}]
  %s2 = inlined_call_operand.vmem [shape: f32[1,16], index: 2, kind: input, shape index: {}]
  %s3 = inlined_call_operand.vmem [shape: f32[8,16], index: 3, kind: input, shape index: {}]
  %s4 = inlined_call_operand.hbm [shape: f32[8,16], index: 4, kind: output, shape index: {0}]
  %s5 = inlined_call_operand.hbm [shape: f32[1,1,16], index: 5, kind: output, shape index: {1}]
  %6 = xla_tuple %s4, %s5
  %s7 = sld [smem:[#allocation0]]
  $region34: #{tpu_custom_call.1} parent=0
    _
  %s9 = ssub.s32 1, %s7
  %s10 = scalar_select 0, %s9, %s7
  $region1: #{tpu_custom_call.1} parent=0
    #allocation2 [shape = 'u8[4096]{0}', space=vmem, size = 0x1000, scoped, tag = 'output window, operand 0, single buffered']
    #allocation3 [shape = 's32[1]{0}', space=sflag, size = 0x4, scoped, tag = 'scoped memory for tpu_custom_call.1']
    #allocation4 [shape = 'u8[512]{0}', space=vmem, size = 0x400, scoped, tag = 'output window, operand 1, single buffered']
    #allocation5 [shape = 's32[1]{0}', space=sflag, size = 0x4, scoped, tag = 'scoped memory for tpu_custom_call.1']
    %11 = vsyncpa [#allocation3], 0
    %12 = vsyncpa [#allocation5], 0
    // Predicated region
    $region2: #{tpu_custom_call.1} parent=1 // pred_check
      _
    $region3: #{tpu_custom_call.1} parent=1 // pred_check_branch
      %14 = sbr.rel (0) target = $region5
    $region4: #{tpu_custom_call.1} parent=1 // pred_region
      _
    $region5: #{tpu_custom_call.1} parent=1 // pred_fallthru
      _
    // Predicated region
    $region6: #{tpu_custom_call.1} parent=1 // pred_check
      _
    $region7: #{tpu_custom_call.1} parent=1 // pred_check_branch
      %16 = sbr.rel (0) target = $region9
    $region8: #{tpu_custom_call.1} parent=1 // pred_region
      _
    $region9: #{tpu_custom_call.1} parent=1 // pred_fallthru
      _
    // Predicated region
    $region10: #{tpu_custom_call.1} parent=1 // pred_check
      _
    $region11: #{tpu_custom_call.1} parent=1 // pred_check_branch
      %18 = sbr.rel (0) target = $region13
    $region12: #{tpu_custom_call.1} parent=1 // pred_region
      _
    $region13: #{tpu_custom_call.1} parent=1 // pred_fallthru
      _
    // Predicated region
    $region14: #{tpu_custom_call.1} parent=1 // pred_check
      _
    $region15: #{tpu_custom_call.1} parent=1 // pred_check_branch
      %20 = sbr.rel (0) target = $region17
    $region16: #{tpu_custom_call.1} parent=1 // pred_region
      _
    $region17: #{tpu_custom_call.1} parent=1 // pred_fallthru
      _
    %v21 = vld [vmem:[%s0] sm:$0xff]
    %v22 = vld [vmem:[%s1] sm:$0xff]
    %v23 = vld [vmem:[%s1 + $0x8] sm:$0xff]
    %v24 = vld [vmem:[%s1 + $0x10] sm:$0xff]
    %v25 = vld [vmem:[%s1 + $0x18] sm:$0xff]
    %v26 = vld [vmem:[%s2] sm:$0x1]
    %v28 = vlaneseq
    %v29 = vshrl.u32 %v28, 7
    %v30 = vsub.s32 0, %v29
    %v31 = vrot.slane %v26, %v30
    %vm33 = vcmask 261120
    %v35 = vsel %vm33, %v21, 0
    %37 = vmatprep.subr.mxu0 0.0
    %38 = vmatpush1.msra.mxu0 %v22
    %39 = vmatprep.subr.mxu0 0.0
    %40 = vmatpush1.msra.mxu0 %v23
    %41 = vmatprep.subr.mxu0 0.0
    %42 = vmatpush1.msra.mxu0 %v24
    %43 = vmatprep.subr.mxu0 0.0
    %44 = vmatpush1.msra.mxu0 %v25
    %45 = vmatprep.subr.mxu0 0.0
    %46 = vmatpush1.msra.mxu0 0.0
    %47 = vmatprep.subr.mxu0 0.0
    %48 = vmatpush1.msra.mxu0 0.0
    %49 = vmatprep.subr.mxu0 0.0
    %50 = vmatpush1.msra.mxu0 0.0
    %51 = vmatprep.subr.mxu0 0.0
    %52 = vmatpush1.msra.mxu0 0.0
    %53 = vmatprep.subr.mxu0 0.0
    %54 = vmatpush1.msra.mxu0 0.0
    %55 = vmatprep.subr.mxu0 0.0
    %56 = vmatpush1.msra.mxu0 0.0
    %57 = vmatprep.subr.mxu0 0.0
    %58 = vmatpush1.msra.mxu0 0.0
    %59 = vmatprep.subr.mxu0 0.0
    %60 = vmatpush1.msra.mxu0 0.0
    %61 = vmatprep.subr.mxu0 0.0
    %62 = vmatpush1.msra.mxu0 0.0
    %63 = vmatprep.subr.mxu0 0.0
    %64 = vmatpush1.msra.mxu0 0.0
    %65 = vmatprep.subr.mxu0 0.0
    %66 = vmatpush1.msra.mxu0 0.0
    %67 = vmatprep.subr.mxu0 0.0
    %68 = vmatpush1.msra.mxu0 0.0
    %69 = vmatprep.subr.mxu0 0.0
    %70 = vmatpush1.msra.mxu0 0.0
    %71 = vmatprep.subr.mxu0 0.0
    %72 = vmatpush1.msra.mxu0 0.0
    %73 = vmatprep.subr.mxu0 0.0
    %74 = vmatpush1.msra.mxu0 0.0
    %75 = vmatprep.subr.mxu0 0.0
    %76 = vmatpush1.msra.mxu0 0.0
    %77 = vmatprep.subr.mxu0 0.0
    %78 = vmatpush1.msra.mxu0 0.0
    %79 = vmatprep.subr.mxu0 0.0
    %80 = vmatpush1.msra.mxu0 0.0
    %81 = vmatprep.subr.mxu0 0.0
    %82 = vmatpush1.msra.mxu0 0.0
    %83 = vmatprep.subr.mxu0 0.0
    %84 = vmatpush1.msra.mxu0 0.0
    %85 = vmatprep.subr.mxu0 0.0
    %86 = vmatpush1.msra.mxu0 0.0
    %87 = vmatprep.subr.mxu0 0.0
    %88 = vmatpush1.msra.mxu0 0.0
    %89 = vmatprep.subr.mxu0 0.0
    %90 = vmatpush1.msra.mxu0 0.0
    %91 = vmatprep.subr.mxu0 0.0
    %92 = vmatpush1.msra.mxu0 0.0
    %93 = vmatprep.subr.mxu0 0.0
    %94 = vmatpush1.msra.mxu0 0.0
    %95 = vmatprep.subr.mxu0 0.0
    %96 = vmatpush1.msra.mxu0 0.0
    %97 = vmatprep.subr.mxu0 0.0
    %98 = vmatpush1.msra.mxu0 0.0
    %99 = vmatprep.subr.mxu0 0.0
    %100 = vmatpush1.msra.mxu0 0.0
    %101 = vmatprep.mubr.f32.mxu0 0.0
    %102 = vmatmul.mubr.f32.gmra.mrb[0].mxu0 %v35
    %v103 = vpop.f32.mrb[0].mxu0
    %v104 = vadd.f32 %v31, %v103
    %v105 = vpop.f32.mrb[0].mxu0
    %106 = vdwg.mxu0
    %vm107 = vcmask 130048
    %108 = vst.msk [vmem:[#allocation2] sm:$0xff] %vm107, %v104
    %v109 = vld [vmem:[%s3] sm:$0xff]
    %v110 = vsub.f32 %v104, %v109
    %v111 = vmul.f32 %v110, %v110
    %v112 = vsel %vm107, %v111, 0.0
    %v113 = vrot.slane %v112, 4
    %v114 = vadd.f32 %v112, %v113
    %v115 = vrot.slane %v114, 2
    %v116 = vadd.f32 %v114, %v115
    %v117 = vrot.slane %v116, 1
    %v118 = vadd.f32 %v116, %v117
    %vm119 = vcmask 122880
    %120 = vst.msk [vmem:[#allocation4] sm:$0x1] %vm119, %v118
    // Predicated region
    $region18: #{tpu_custom_call.1} parent=1 // pred_check
      _
    $region19: #{tpu_custom_call.1} parent=1 // pred_check_branch
      %122 = sbr.rel (0) target = $region21
    $region20: #{tpu_custom_call.1} parent=1 // pred_region
      %s124 = ssub.s32 128, 128
      %125 = vsyncadd [#allocation3], %s124
      %s127 = sshll.u32 [#allocation2], 4
      %s128 = int_to_ptr.vmem [resolvable:$true] %s127
      %130 = dma.vmem_to_hbm [thread:$0]  %s128, 128, %s4, [#allocation3]
    $region21: #{tpu_custom_call.1} parent=1 // pred_fallthru
      _
    // Predicated region
    $region22: #{tpu_custom_call.1} parent=1 // pred_check
      _
    $region23: #{tpu_custom_call.1} parent=1 // pred_check_branch
      %132 = sbr.rel (0) target = $region25
    $region24: #{tpu_custom_call.1} parent=1 // pred_region
      %s134 = ssub.s32 16, 16
      %135 = vsyncadd [#allocation5], %s134
      %s137 = sshll.u32 [#allocation4], 4
      %s138 = int_to_ptr.vmem [resolvable:$true] %s137
      %140 = dma.vmem_to_hbm [thread:$0]  %s138, 16, %s5, [#allocation5]
    $region25: #{tpu_custom_call.1} parent=1 // pred_fallthru
      _
    // Predicated region
    $region26: #{tpu_custom_call.1} parent=1 // pred_check
      _
    $region27: #{tpu_custom_call.1} parent=1 // pred_check_branch
      %142 = sbr.rel (0) target = $region29
    $region28: #{tpu_custom_call.1} parent=1 // pred_region
      %143 = dma.done [#allocation3], 128
    $region29: #{tpu_custom_call.1} parent=1 // pred_fallthru
      _
    // Predicated region
    $region30: #{tpu_custom_call.1} parent=1 // pred_check
      _
    $region31: #{tpu_custom_call.1} parent=1 // pred_check_branch
      %145 = sbr.rel (0) target = $region33
    $region32: #{tpu_custom_call.1} parent=1 // pred_region
      %146 = dma.done [#allocation5], 16
    $region33: #{tpu_custom_call.1} parent=1 // pred_fallthru
      _
    %147 = vsyncpa [#allocation3], 1
    %148 = vsyncpa [#allocation5], 1

</llo_original>
